<compile_context>
chip_gen: v7x
topology: tpu7x:2x2x1
jax: 0.10.0
libtpu: 0.0.40
codegen_flags: <defaults>
</compile_context>

<pallas_src>
import jax
import jax.numpy as jnp
from jax.experimental import pallas as pl
from jax.experimental.pallas import tpu as pltpu

INPUT_DIM = 128
PET_DIM = 5
CLIN_DIM = 6
PC_DIM = PET_DIM + CLIN_DIM       # 11
PC_PAD = 16                       # zero-padded pet+clinical slab width
HID1 = 256
HID2 = 128
NUM_HEADS = 3                     # [dfs, os, cls]


def _round_up(x, m):
    return ((x + m - 1) // m) * m


def fusion_kernel(les_ref, spc_ref, rad_ref, pc_ref,
                  w1a_ref, w1b_ref, w1c_ref, b1_ref,
                  w2_ref, b2_ref,
                  whf_ref, whpc_ref, bh_ref,
                  out_ref):
    bf16 = jnp.bfloat16
    # NOTE: a partial last batch tile reads unspecified rows past B. Every op below
    # is row-wise (no cross-row reduction), and the corresponding output lanes are
    # masked on writeback, so valid rows are unaffected. Do not add cross-row
    # reductions here without masking.

    # --- fc_merge layer 1: Linear(384,256) as three 128-wide dots (no concat) ---
    # Weights arrive pre-cast to bf16 (grid-resident, no per-step cast); activation
    # casts are no-ops if the producer already emits bf16 features.
    # TODO(synk): on v6e/v7x a single K=384 dot saves ~20-30% MXU cycles, but only
    # if the upstream producer can emit a fused (B,384) bf16 slab; with three
    # separate inputs the concat-free 3-dot form is kept (also optimal on v5e).
    h1 = (jnp.dot(les_ref[...].astype(bf16), w1a_ref[...],
                  preferred_element_type=jnp.float32)
          + jnp.dot(spc_ref[...].astype(bf16), w1b_ref[...],
                    preferred_element_type=jnp.float32)
          + jnp.dot(rad_ref[...].astype(bf16), w1c_ref[...],
                    preferred_element_type=jnp.float32)
          + b1_ref[...])                               # (tb, 256) f32
    h1 = jnp.maximum(h1, 0.0)                          # ReLU in f32
    # TODO(synk): Dropout(0.3) is inference-mode identity (no RNG masking).

    # --- fc_merge layer 2: Linear(256,128) + ReLU ---
    fused = jnp.dot(h1.astype(bf16), w2_ref[...],
                    preferred_element_type=jnp.float32) + b2_ref[...]
    fused = jnp.maximum(fused, 0.0)                    # (tb, 128) f32

    # --- three heads jointly over the split 139-dim feature (f32, tiny matmuls) ---
    heads = (jnp.dot(fused, whf_ref[...], preferred_element_type=jnp.float32)
             + jnp.dot(pc_ref[...], whpc_ref[...], preferred_element_type=jnp.float32)
             + bh_ref[...])                            # (tb, 3) f32

    # Lane-dense writeback: tb (multiple of 128 when tiled) sits on the lane axis,
    # giving unmasked stores and contiguous row slices in the wrapper.
    out_ref[...] = heads.T                             # (3, tb)


def patient_level_fusion_forward(lesion_feat, space_feat, radiomics_feat,
                                 pet_feat, clinical_feat, params, tb=2048):
    """Fused forward. Returns (dfs (B,), os (B,), cls (B,1))."""
    B = lesion_feat.shape[0]
    w1a, w1b, w1c, b1, w2, b2, whf, whpc, bh = params

    # One-time bf16 cast of the two big weight matrices (they are grid-resident in
    # VMEM, so no per-step VPU cast inside the kernel). Biases/head weights stay f32.
    bf16 = jnp.bfloat16
    w1a, w1b, w1c, w2 = (w.astype(bf16) for w in (w1a, w1b, w1c, w2))

    # Tiny glue: pack pet(5)+clinical(6) into one zero-padded lane-friendly (B,16)
    # slab. Padded columns hit the all-zero rows 11..15 of whpc -> math unchanged.
    pc = jnp.concatenate(
        [pet_feat, clinical_feat,
         jnp.zeros((B, PC_PAD - PC_DIM), pet_feat.dtype)], axis=1)

    # Batch-tile selection:
    #  * tiled tb must be a multiple of 128 (lane-dense transposed output blocks),
    #  * large B defaults to >=2 grid steps so v7x megacore has work to shard,
    #  * small B uses one full-extent block.
    if B <= tb:
        tb = _round_up(pl.cdiv(B, 2), 128) if B >= 256 else B
    else:
        tb = _round_up(tb, 128)
    grid = (pl.cdiv(B, tb),)

    def batch_spec(cols):
        return pl.BlockSpec((tb, cols), lambda i: (i, 0))

    def resident_spec(shape):
        # Weights/biases: same block every grid step -> VMEM-resident, DMA'd once.
        # (pl.Buffered(1) would drop the unused second buffer; skipped — they total
        #  <0.5 MiB and it is irrelevant at this footprint.)
        return pl.BlockSpec(shape, lambda i: (0, 0))

    flops = 2 * B * (3 * INPUT_DIM * HID1 + HID1 * HID2 + (HID2 + PC_PAD) * NUM_HEADS)
    bytes_accessed = (B * (3 * INPUT_DIM + PC_PAD + NUM_HEADS) * 4
                      + 2 * (3 * INPUT_DIM * HID1 + HID1 * HID2)          # bf16 weights
                      + 4 * ((HID2 + PC_PAD) * NUM_HEADS + HID1 + HID2 + NUM_HEADS))
    cost = pl.CostEstimate(flops=flops, transcendentals=0,
                           bytes_accessed=bytes_accessed)

    out = pl.pallas_call(
        fusion_kernel,
        out_shape=jax.ShapeDtypeStruct((NUM_HEADS, B), jnp.float32),
        grid=grid,
        in_specs=[
            batch_spec(INPUT_DIM),                 # lesion
            batch_spec(INPUT_DIM),                 # space
            batch_spec(INPUT_DIM),                 # radiomics
            batch_spec(PC_PAD),                    # pet+clinical (padded)
            resident_spec((INPUT_DIM, HID1)),      # w1a (bf16)
            resident_spec((INPUT_DIM, HID1)),      # w1b (bf16)
            resident_spec((INPUT_DIM, HID1)),      # w1c (bf16)
            resident_spec((1, HID1)),              # b1  (f32)
            resident_spec((HID1, HID2)),           # w2  (bf16)
            resident_spec((1, HID2)),              # b2  (f32)
            resident_spec((HID2, NUM_HEADS)),      # whf (f32)
            resident_spec((PC_PAD, NUM_HEADS)),    # whpc (f32, rows 11..15 MUST be 0)
            resident_spec((1, NUM_HEADS)),         # bh  (f32)
        ],
        # transposed, lane-dense output: (3, tb) blocks along the batch axis
        out_specs=pl.BlockSpec((NUM_HEADS, tb), lambda i: (0, i)),
        compiler_params=pltpu.CompilerParams(
            dimension_semantics=("parallel",),
            vmem_limit_bytes=32 * 1024 * 1024),    # covers tb=2048 f32 acts on v5e
        cost_estimate=cost,
    )(lesion_feat, space_feat, radiomics_feat, pc,
      w1a, w1b, w1c, b1, w2, b2, whf, whpc, bh)

    dfs = out[0]           # (B,)  == fc_dfs(full_feat).squeeze(1)
    os_ = out[1]           # (B,)  == fc_os(full_feat).squeeze(1)
    cls = out[2:3].T       # (B,1) == fc_cls(full_feat)
    return dfs, os_, cls


def init_params(key):
    """Deterministic synthetic parameters with the shapes implied by __init__."""
    ks = jax.random.split(key, 6)
    scale = 0.02
    w1 = scale * jax.random.normal(ks[0], (3 * INPUT_DIM, HID1), jnp.float32)
    w1a, w1b, w1c = w1[:INPUT_DIM], w1[INPUT_DIM:2 * INPUT_DIM], w1[2 * INPUT_DIM:]
    b1 = scale * jax.random.normal(ks[1], (1, HID1), jnp.float32)
    w2 = scale * jax.random.normal(ks[2], (HID1, HID2), jnp.float32)
    b2 = scale * jax.random.normal(ks[3], (1, HID2), jnp.float32)
    # head weights: three (139,1) Linears packed as columns [dfs, os, cls]
    wh_full = scale * jax.random.normal(ks[4], (HID2 + PC_DIM, NUM_HEADS), jnp.float32)
    whf = wh_full[:HID2, :]                                        # (128, 3)
    # rows 11..15 are zero so the padded pc columns contribute nothing (any
    # checkpoint-loading path must replicate this zero padding).
    whpc = jnp.concatenate(                                        # (16, 3)
        [wh_full[HID2:, :], jnp.zeros((PC_PAD - PC_DIM, NUM_HEADS), jnp.float32)], axis=0)
    bh = scale * jax.random.normal(ks[5], (1, NUM_HEADS), jnp.float32)
    return (w1a, w1b, w1c, b1, w2, b2, whf, whpc, bh)


def reference_forward(lesion, space, radiomics, pet, clin, params):
    """Plain f32 JAX reference mirroring the PyTorch forward (eval mode)."""
    w1a, w1b, w1c, b1, w2, b2, whf, whpc, bh = params
    w1 = jnp.concatenate([w1a, w1b, w1c], axis=0)                  # (384, 256)
    wh = jnp.concatenate([whf, whpc[:PC_DIM, :]], axis=0)          # (139, 3)
    x = jnp.concatenate([lesion, space, radiomics], axis=1)
    h1 = jnp.maximum(x @ w1 + b1, 0.0)
    fused = jnp.maximum(h1 @ w2 + b2, 0.0)
    full = jnp.concatenate([fused, pet, clin], axis=1)
    heads = full @ wh + bh
    return heads[:, 0], heads[:, 1], heads[:, 2:3]


def _check(B, key, params, tb):
    kl, ks, kr, kpet, kcl = jax.random.split(key, 5)
    lesion = jax.random.normal(kl, (B, INPUT_DIM), jnp.float32)
    space = jax.random.normal(ks, (B, INPUT_DIM), jnp.float32)
    radiomics = jax.random.normal(kr, (B, INPUT_DIM), jnp.float32)
    pet = jax.random.normal(kpet, (B, PET_DIM), jnp.float32)
    clin = jax.random.normal(kcl, (B, CLIN_DIM), jnp.float32)

    dfs, os_, cls = patient_level_fusion_forward(lesion, space, radiomics, pet, clin,
                                                 params, tb=tb)
    jax.block_until_ready((dfs, os_, cls))

    rdfs, ros, rcls = reference_forward(lesion, space, radiomics, pet, clin, params)
    assert dfs.shape == (B,) and os_.shape == (B,) and cls.shape == (B, 1)
    # bf16 operands for the two big matmuls (f32 accumulation) -> loose but safe tolerance
    assert jnp.allclose(dfs, rdfs, atol=1e-2, rtol=5e-2)
    assert jnp.allclose(os_, ros, atol=1e-2, rtol=5e-2)
    assert jnp.allclose(cls, rcls, atol=1e-2, rtol=5e-2)


if __name__ == "__main__":
    key = jax.random.PRNGKey(0)
    kp, k_small, k_mid, k_big = jax.random.split(key, 4)
    params = init_params(kp)

    # small sanity shape (single full-extent block)
    _check(B=2, key=k_small, params=params, tb=2048)
    # explicit-tb multi-step grid with a partial last tile (tiling / writeback masking)
    _check(B=300, key=k_mid, params=params, tb=128)
    # default tb path: auto-split into >=2 grid steps (megacore) with partial last tile
    _check(B=640, key=k_big, params=params, tb=2048)

    print("KERNEL_OK")
</pallas_src>

<mosaic_0001>
module attributes {stable_mosaic.version = 11 : i64} {
  func.func @fusion_kernel(%arg0: i32, %arg1: memref<2x128xf32, #tpu.memory_space<vmem>>, %arg2: memref<2x128xf32, #tpu.memory_space<vmem>>, %arg3: memref<2x128xf32, #tpu.memory_space<vmem>>, %arg4: memref<2x16xf32, #tpu.memory_space<vmem>>, %arg5: memref<128x256xbf16, #tpu.memory_space<vmem>>, %arg6: memref<128x256xbf16, #tpu.memory_space<vmem>>, %arg7: memref<128x256xbf16, #tpu.memory_space<vmem>>, %arg8: memref<1x256xf32, #tpu.memory_space<vmem>>, %arg9: memref<256x128xbf16, #tpu.memory_space<vmem>>, %arg10: memref<1x128xf32, #tpu.memory_space<vmem>>, %arg11: memref<128x3xf32, #tpu.memory_space<vmem>>, %arg12: memref<16x3xf32, #tpu.memory_space<vmem>>, %arg13: memref<1x3xf32, #tpu.memory_space<vmem>>, %arg14: memref<3x2xf32, #tpu.memory_space<vmem>>) attributes {dimension_semantics = [#tpu.dimension_semantics<parallel>], iteration_bounds = array<i64: 1>, scalar_prefetch = 0 : i64, scratch_operands = 0 : i64, tpu.core_type = #tpu.core_type<tc>, window_params = [{transform_indices = @transform_0, window_bounds = array<i64: 2, 128>}, {transform_indices = @transform_1, window_bounds = array<i64: 2, 128>}, {transform_indices = @transform_2, window_bounds = array<i64: 2, 128>}, {transform_indices = @transform_3, window_bounds = array<i64: 2, 16>}, {pipeline_mode = #tpu.pipeline_mode<synchronous>, transform_indices = @transform_4, window_bounds = array<i64: 128, 256>}, {pipeline_mode = #tpu.pipeline_mode<synchronous>, transform_indices = @transform_5, window_bounds = array<i64: 128, 256>}, {pipeline_mode = #tpu.pipeline_mode<synchronous>, transform_indices = @transform_6, window_bounds = array<i64: 128, 256>}, {pipeline_mode = #tpu.pipeline_mode<synchronous>, transform_indices = @transform_7, window_bounds = array<i64: 1, 256>}, {pipeline_mode = #tpu.pipeline_mode<synchronous>, transform_indices = @transform_8, window_bounds = array<i64: 256, 128>}, {pipeline_mode = #tpu.pipeline_mode<synchronous>, transform_indices = @transform_9, window_bounds = array<i64: 1, 128>}, {pipeline_mode = #tpu.pipeline_mode<synchronous>, transform_indices = @transform_10, window_bounds = array<i64: 128, 3>}, {pipeline_mode = #tpu.pipeline_mode<synchronous>, transform_indices = @transform_11, window_bounds = array<i64: 16, 3>}, {pipeline_mode = #tpu.pipeline_mode<synchronous>, transform_indices = @transform_12, window_bounds = array<i64: 1, 3>}, {transform_indices = @transform_13, window_bounds = array<i64: 3, 2>}]} {
    %c0 = arith.constant 0 : index
    %c0_0 = arith.constant 0 : index
    %0 = vector.load %arg1[%c0, %c0_0] : memref<2x128xf32, #tpu.memory_space<vmem>>, vector<2x128xf32>
    %1 = arith.truncf %0 : vector<2x128xf32> to vector<2x128xbf16>
    %c0_1 = arith.constant 0 : index
    %c0_2 = arith.constant 0 : index
    %2 = vector.load %arg5[%c0_1, %c0_2] : memref<128x256xbf16, #tpu.memory_space<vmem>>, vector<128x256xbf16>
    %cst = arith.constant dense<0.000000e+00> : vector<2x256xf32>
    %3 = tpu.matmul %1, %2, %cst {dimension_numbers = #tpu.dot_dimension_numbers<[1], [0], [0], [1], [0, 0, 1, 1], [], []>} : vector<2x128xbf16>, vector<128x256xbf16>, vector<2x256xf32> -> vector<2x256xf32>
    %c0_3 = arith.constant 0 : index
    %c0_4 = arith.constant 0 : index
    %4 = vector.load %arg2[%c0_3, %c0_4] : memref<2x128xf32, #tpu.memory_space<vmem>>, vector<2x128xf32>
    %5 = arith.truncf %4 : vector<2x128xf32> to vector<2x128xbf16>
    %c0_5 = arith.constant 0 : index
    %c0_6 = arith.constant 0 : index
    %6 = vector.load %arg6[%c0_5, %c0_6] : memref<128x256xbf16, #tpu.memory_space<vmem>>, vector<128x256xbf16>
    %cst_7 = arith.constant dense<0.000000e+00> : vector<2x256xf32>
    %7 = tpu.matmul %5, %6, %cst_7 {dimension_numbers = #tpu.dot_dimension_numbers<[1], [0], [0], [1], [0, 0, 1, 1], [], []>} : vector<2x128xbf16>, vector<128x256xbf16>, vector<2x256xf32> -> vector<2x256xf32>
    %8 = arith.addf %3, %7 : vector<2x256xf32>
    %c0_8 = arith.constant 0 : index
    %c0_9 = arith.constant 0 : index
    %9 = vector.load %arg3[%c0_8, %c0_9] : memref<2x128xf32, #tpu.memory_space<vmem>>, vector<2x128xf32>
    %10 = arith.truncf %9 : vector<2x128xf32> to vector<2x128xbf16>
    %c0_10 = arith.constant 0 : index
    %c0_11 = arith.constant 0 : index
    %11 = vector.load %arg7[%c0_10, %c0_11] : memref<128x256xbf16, #tpu.memory_space<vmem>>, vector<128x256xbf16>
    %cst_12 = arith.constant dense<0.000000e+00> : vector<2x256xf32>
    %12 = tpu.matmul %10, %11, %cst_12 {dimension_numbers = #tpu.dot_dimension_numbers<[1], [0], [0], [1], [0, 0, 1, 1], [], []>} : vector<2x128xbf16>, vector<128x256xbf16>, vector<2x256xf32> -> vector<2x256xf32>
    %13 = arith.addf %8, %12 : vector<2x256xf32>
    %c0_13 = arith.constant 0 : index
    %c0_14 = arith.constant 0 : index
    %14 = vector.load %arg8[%c0_13, %c0_14] : memref<1x256xf32, #tpu.memory_space<vmem>>, vector<1x256xf32>
    %15 = vector.broadcast %14 : vector<1x256xf32> to vector<2x256xf32>
    %16 = arith.addf %13, %15 : vector<2x256xf32>
    %cst_15 = arith.constant 0.000000e+00 : f32
    %17 = vector.broadcast %cst_15 : f32 to vector<2x256xf32>
    %18 = arith.maximumf %16, %17 : vector<2x256xf32>
    %19 = arith.truncf %18 : vector<2x256xf32> to vector<2x256xbf16>
    %c0_16 = arith.constant 0 : index
    %c0_17 = arith.constant 0 : index
    %20 = vector.load %arg9[%c0_16, %c0_17] : memref<256x128xbf16, #tpu.memory_space<vmem>>, vector<256x128xbf16>
    %cst_18 = arith.constant dense<0.000000e+00> : vector<2x128xf32>
    %21 = tpu.matmul %19, %20, %cst_18 {dimension_numbers = #tpu.dot_dimension_numbers<[1], [0], [0], [1], [0, 0, 1, 1], [], []>} : vector<2x256xbf16>, vector<256x128xbf16>, vector<2x128xf32> -> vector<2x128xf32>
    %c0_19 = arith.constant 0 : index
    %c0_20 = arith.constant 0 : index
    %22 = vector.load %arg10[%c0_19, %c0_20] : memref<1x128xf32, #tpu.memory_space<vmem>>, vector<1x128xf32>
    %23 = vector.broadcast %22 : vector<1x128xf32> to vector<2x128xf32>
    %24 = arith.addf %21, %23 : vector<2x128xf32>
    %cst_21 = arith.constant 0.000000e+00 : f32
    %25 = vector.broadcast %cst_21 : f32 to vector<2x128xf32>
    %26 = arith.maximumf %24, %25 : vector<2x128xf32>
    %c0_22 = arith.constant 0 : index
    %c0_23 = arith.constant 0 : index
    %27 = vector.load %arg11[%c0_22, %c0_23] : memref<128x3xf32, #tpu.memory_space<vmem>>, vector<128x3xf32>
    %cst_24 = arith.constant dense<0.000000e+00> : vector<2x3xf32>
    %28 = tpu.matmul %26, %27, %cst_24 {dimension_numbers = #tpu.dot_dimension_numbers<[1], [0], [0], [1], [0, 0, 1, 1], [], []>} : vector<2x128xf32>, vector<128x3xf32>, vector<2x3xf32> -> vector<2x3xf32>
    %c0_25 = arith.constant 0 : index
    %c0_26 = arith.constant 0 : index
    %29 = vector.load %arg4[%c0_25, %c0_26] : memref<2x16xf32, #tpu.memory_space<vmem>>, vector<2x16xf32>
    %c0_27 = arith.constant 0 : index
    %c0_28 = arith.constant 0 : index
    %30 = vector.load %arg12[%c0_27, %c0_28] : memref<16x3xf32, #tpu.memory_space<vmem>>, vector<16x3xf32>
    %cst_29 = arith.constant dense<0.000000e+00> : vector<2x3xf32>
    %31 = tpu.matmul %29, %30, %cst_29 {dimension_numbers = #tpu.dot_dimension_numbers<[1], [0], [0], [1], [0, 0, 1, 1], [], []>} : vector<2x16xf32>, vector<16x3xf32>, vector<2x3xf32> -> vector<2x3xf32>
    %32 = arith.addf %28, %31 : vector<2x3xf32>
    %c0_30 = arith.constant 0 : index
    %c0_31 = arith.constant 0 : index
    %33 = vector.load %arg13[%c0_30, %c0_31] : memref<1x3xf32, #tpu.memory_space<vmem>>, vector<1x3xf32>
    %34 = vector.broadcast %33 : vector<1x3xf32> to vector<2x3xf32>
    %35 = arith.addf %32, %34 : vector<2x3xf32>
    %36 = tpu.transpose %35, [1, 0] : vector<2x3xf32> -> vector<3x2xf32>
    %c0_32 = arith.constant 0 : index
    %c0_33 = arith.constant 0 : index
    %37 = vector.load %arg14[%c0_32, %c0_33] : memref<3x2xf32, #tpu.memory_space<vmem>>, vector<3x2xf32>
    tpu.vector_store %arg14[%c0_32, %c0_33], %36 {strides = array<i32>} : memref<3x2xf32, #tpu.memory_space<vmem>>, vector<3x2xf32>,
    return
  }
  func.func @transform_0(%arg0: i32) -> (i32, i32) {
    %c0_i32 = arith.constant 0 : i32
    %c0_i32_0 = arith.constant 0 : i32
    return %arg0, %c0_i32 : i32, i32
  }
  func.func @transform_1(%arg0: i32) -> (i32, i32) {
    %c0_i32 = arith.constant 0 : i32
    %c0_i32_0 = arith.constant 0 : i32
    return %arg0, %c0_i32 : i32, i32
  }
  func.func @transform_2(%arg0: i32) -> (i32, i32) {
    %c0_i32 = arith.constant 0 : i32
    %c0_i32_0 = arith.constant 0 : i32
    return %arg0, %c0_i32 : i32, i32
  }
  func.func @transform_3(%arg0: i32) -> (i32, i32) {
    %c0_i32 = arith.constant 0 : i32
    %c0_i32_0 = arith.constant 0 : i32
    return %arg0, %c0_i32 : i32, i32
  }
  func.func @transform_4(%arg0: i32) -> (i32, i32) {
    %c0_i32 = arith.constant 0 : i32
    %c0_i32_0 = arith.constant 0 : i32
    %c0_i32_1 = arith.constant 0 : i32
    return %c0_i32, %c0_i32_0 : i32, i32
  }
  func.func @transform_5(%arg0: i32) -> (i32, i32) {
    %c0_i32 = arith.constant 0 : i32
    %c0_i32_0 = arith.constant 0 : i32
    %c0_i32_1 = arith.constant 0 : i32
    return %c0_i32, %c0_i32_0 : i32, i32
  }
  func.func @transform_6(%arg0: i32) -> (i32, i32) {
    %c0_i32 = arith.constant 0 : i32
    %c0_i32_0 = arith.constant 0 : i32
    %c0_i32_1 = arith.constant 0 : i32
    return %c0_i32, %c0_i32_0 : i32, i32
  }
  func.func @transform_7(%arg0: i32) -> (i32, i32) {
    %c0_i32 = arith.constant 0 : i32
    %c0_i32_0 = arith.constant 0 : i32
    %c0_i32_1 = arith.constant 0 : i32
    return %c0_i32, %c0_i32_0 : i32, i32
  }
  func.func @transform_8(%arg0: i32) -> (i32, i32) {
    %c0_i32 = arith.constant 0 : i32
    %c0_i32_0 = arith.constant 0 : i32
    %c0_i32_1 = arith.constant 0 : i32
    return %c0_i32, %c0_i32_0 : i32, i32
  }
  func.func @transform_9(%arg0: i32) -> (i32, i32) {
    %c0_i32 = arith.constant 0 : i32
    %c0_i32_0 = arith.constant 0 : i32
    %c0_i32_1 = arith.constant 0 : i32
    return %c0_i32, %c0_i32_0 : i32, i32
  }
  func.func @transform_10(%arg0: i32) -> (i32, i32) {
    %c0_i32 = arith.constant 0 : i32
    %c0_i32_0 = arith.constant 0 : i32
    %c0_i32_1 = arith.constant 0 : i32
    return %c0_i32, %c0_i32_0 : i32, i32
  }
  func.func @transform_11(%arg0: i32) -> (i32, i32) {
    %c0_i32 = arith.constant 0 : i32
    %c0_i32_0 = arith.constant 0 : i32
    %c0_i32_1 = arith.constant 0 : i32
    return %c0_i32, %c0_i32_0 : i32, i32
  }
  func.func @transform_12(%arg0: i32) -> (i32, i32) {
    %c0_i32 = arith.constant 0 : i32
    %c0_i32_0 = arith.constant 0 : i32
    %c0_i32_1 = arith.constant 0 : i32
    return %c0_i32, %c0_i32_0 : i32, i32
  }
  func.func @transform_13(%arg0: i32) -> (i32, i32) {
    %c0_i32 = arith.constant 0 : i32
    %c0_i32_0 = arith.constant 0 : i32
    return %c0_i32, %arg0 : i32, i32
  }
}

</mosaic_0001>

<llo_original>
// kernel: tpu_custom_call.1
$region0: #{tpu_custom_call.1}
  #allocation0 [shape = 'u32[]', space=smem, size = 0x4, offset = 0x4, fixed_abs, tag = 'smem constant byte address 0x4 - core index']
  #allocation1 [shape = 'u32[144,128]{1,0:T(1,128)}', space=vmem, size = 0x12000, scoped, tag = 'internal scratch']
  %s0 = inlined_call_operand.vmem [shape: f32[2,128], index: 0, kind: input, shape index: {}]
  %s1 = inlined_call_operand.vmem [shape: f32[2,128], index: 1, kind: input, shape index: {}]
  %s2 = inlined_call_operand.vmem [shape: f32[2,128], index: 2, kind: input, shape index: {}]
  %s3 = inlined_call_operand.vmem [shape: f32[2,16], index: 3, kind: input, shape index: {}]
  %s4 = inlined_call_operand.vmem [shape: bf16[128,256], index: 4, kind: input, shape index: {}]
  %s5 = inlined_call_operand.hbm [shape: bf16[128,256], index: 5, kind: input, shape index: {}]
  %s6 = inlined_call_operand.hbm [shape: bf16[128,256], index: 6, kind: input, shape index: {}]
  %s7 = inlined_call_operand.vmem [shape: f32[1,256], index: 7, kind: input, shape index: {}]
  %s8 = inlined_call_operand.hbm [shape: bf16[256,128], index: 8, kind: input, shape index: {}]
  %s9 = inlined_call_operand.vmem [shape: f32[1,128], index: 9, kind: input, shape index: {}]
  %s10 = inlined_call_operand.vmem [shape: f32[128,3], index: 10, kind: input, shape index: {}]
  %s11 = inlined_call_operand.vmem [shape: f32[16,3], index: 11, kind: input, shape index: {}]
  %s12 = inlined_call_operand.vmem [shape: f32[1,3], index: 12, kind: input, shape index: {}]
  %s13 = inlined_call_operand.vmem [shape: f32[3,2], index: 13, kind: output, shape index: {}]
  %s14 = sld [smem:[#allocation0]]
  $region74: #{tpu_custom_call.1} parent=0
    _
  %s16 = ssub.s32 1, %s14
  %s17 = scalar_select 0, %s16, %s14
  $region1: #{tpu_custom_call.1} parent=0
    #allocation2 [shape = 'u8[65536]{0}', space=vmem, size = 0x10000, scoped, tag = 'input window, operand 5, single buffered']
    #allocation3 [shape = 's32[1]{0}', space=sflag, size = 0x4, scoped, tag = 'scoped memory for tpu_custom_call.1']
    #allocation4 [shape = 'u8[65536]{0}', space=vmem, size = 0x10000, scoped, tag = 'input window, operand 6, single buffered']
    #allocation5 [shape = 's32[1]{0}', space=sflag, size = 0x4, scoped, tag = 'scoped memory for tpu_custom_call.1']
    #allocation6 [shape = 'u8[65536]{0}', space=vmem, size = 0x10000, scoped, tag = 'input window, operand 8, single buffered']
    %18 = vsyncpa [#allocation3], 0
    %19 = vsyncpa [#allocation5], 0
    // Predicated region
    $region2: #{tpu_custom_call.1} parent=1 // pred_check
      _
    $region3: #{tpu_custom_call.1} parent=1 // pred_check_branch
      %21 = sbr.rel (0) target = $region5
    $region4: #{tpu_custom_call.1} parent=1 // pred_region
      _
    $region5: #{tpu_custom_call.1} parent=1 // pred_fallthru
      _
    // Predicated region
    $region6: #{tpu_custom_call.1} parent=1 // pred_check
      _
    $region7: #{tpu_custom_call.1} parent=1 // pred_check_branch
      %23 = sbr.rel (0) target = $region9
    $region8: #{tpu_custom_call.1} parent=1 // pred_region
      _
    $region9: #{tpu_custom_call.1} parent=1 // pred_fallthru
      _
    // Predicated region
    $region10: #{tpu_custom_call.1} parent=1 // pred_check
      _
    $region11: #{tpu_custom_call.1} parent=1 // pred_check_branch
      %25 = sbr.rel (0) target = $region13
    $region12: #{tpu_custom_call.1} parent=1 // pred_region
      _
    $region13: #{tpu_custom_call.1} parent=1 // pred_fallthru
      _
    // Predicated region
    $region14: #{tpu_custom_call.1} parent=1 // pred_check
      _
    $region15: #{tpu_custom_call.1} parent=1 // pred_check_branch
      %27 = sbr.rel (0) target = $region17
    $region16: #{tpu_custom_call.1} parent=1 // pred_region
      _
    $region17: #{tpu_custom_call.1} parent=1 // pred_fallthru
      _
    // Predicated region
    $region18: #{tpu_custom_call.1} parent=1 // pred_check
      _
    $region19: #{tpu_custom_call.1} parent=1 // pred_check_branch
      %29 = sbr.rel (0) target = $region21
    $region20: #{tpu_custom_call.1} parent=1 // pred_region
      _
    $region21: #{tpu_custom_call.1} parent=1 // pred_fallthru
      _
    // Predicated region
    $region22: #{tpu_custom_call.1} parent=1 // pred_check
      _
    $region23: #{tpu_custom_call.1} parent=1 // pred_check_branch
      %31 = sbr.rel (0) target = $region25
    $region24: #{tpu_custom_call.1} parent=1 // pred_region
      %s33 = ssub.s32 2048, 2048
      %34 = vsyncadd [#allocation3], %s33
      %s35 = sshll.u32 [#allocation2], 4
      %s36 = int_to_ptr.vmem [resolvable:$true] %s35
      %41 = dma.hbm_to_vmem [thread:$0]  %s5, 2048, %s36, [#allocation3], 128, 128, 8
    $region25: #{tpu_custom_call.1} parent=1 // pred_fallthru
      _
    // Predicated region
    $region26: #{tpu_custom_call.1} parent=1 // pred_check
      _
    $region27: #{tpu_custom_call.1} parent=1 // pred_check_branch
      %43 = sbr.rel (0) target = $region29
    $region28: #{tpu_custom_call.1} parent=1 // pred_region
      %s45 = ssub.s32 2048, 2048
      %46 = vsyncadd [#allocation5], %s45
      %s47 = sshll.u32 [#allocation4], 4
      %s48 = int_to_ptr.vmem [resolvable:$true] %s47
      %53 = dma.hbm_to_vmem [thread:$0]  %s6, 2048, %s48, [#allocation5], 128, 128, 8
    $region29: #{tpu_custom_call.1} parent=1 // pred_fallthru
      _
    // Predicated region
    $region30: #{tpu_custom_call.1} parent=1 // pred_check
      _
    $region31: #{tpu_custom_call.1} parent=1 // pred_check_branch
      %55 = sbr.rel (0) target = $region33
    $region32: #{tpu_custom_call.1} parent=1 // pred_region
      _
    $region33: #{tpu_custom_call.1} parent=1 // pred_fallthru
      _
    // Predicated region
    $region34: #{tpu_custom_call.1} parent=1 // pred_check
      _
    $region35: #{tpu_custom_call.1} parent=1 // pred_check_branch
      %57 = sbr.rel (0) target = $region37
    $region36: #{tpu_custom_call.1} parent=1 // pred_region
      %s59 = ssub.s32 2048, 2048
      %60 = vsyncadd [#allocation5], %s59
      %s61 = sshll.u32 [#allocation6], 4
      %s62 = int_to_ptr.vmem [resolvable:$true] %s61
      %67 = dma.hbm_to_vmem [thread:$0]  %s8, 2048, %s62, [#allocation5], 64, 64, 4
    $region37: #{tpu_custom_call.1} parent=1 // pred_fallthru
      _
    // Predicated region
    $region38: #{tpu_custom_call.1} parent=1 // pred_check
      _
    $region39: #{tpu_custom_call.1} parent=1 // pred_check_branch
      %69 = sbr.rel (0) target = $region41
    $region40: #{tpu_custom_call.1} parent=1 // pred_region
      _
    $region41: #{tpu_custom_call.1} parent=1 // pred_fallthru
      _
    // Predicated region
    $region42: #{tpu_custom_call.1} parent=1 // pred_check
      _
    $region43: #{tpu_custom_call.1} parent=1 // pred_check_branch
      %71 = sbr.rel (0) target = $region45
    $region44: #{tpu_custom_call.1} parent=1 // pred_region
      _
    $region45: #{tpu_custom_call.1} parent=1 // pred_fallthru
      _
    // Predicated region
    $region46: #{tpu_custom_call.1} parent=1 // pred_check
      _
    $region47: #{tpu_custom_call.1} parent=1 // pred_check_branch
      %73 = sbr.rel (0) target = $region49
    $region48: #{tpu_custom_call.1} parent=1 // pred_region
      _
    $region49: #{tpu_custom_call.1} parent=1 // pred_fallthru
      _
    // Predicated region
    $region50: #{tpu_custom_call.1} parent=1 // pred_check
      _
    $region51: #{tpu_custom_call.1} parent=1 // pred_check_branch
      %75 = sbr.rel (0) target = $region53
    $region52: #{tpu_custom_call.1} parent=1 // pred_region
      _
    $region53: #{tpu_custom_call.1} parent=1 // pred_fallthru
      _
    // Predicated region
    $region54: #{tpu_custom_call.1} parent=1 // pred_check
      _
    $region55: #{tpu_custom_call.1} parent=1 // pred_check_branch
      %77 = sbr.rel (0) target = $region57
    $region56: #{tpu_custom_call.1} parent=1 // pred_region
      %78 = dma.done [#allocation3], 2048
    $region57: #{tpu_custom_call.1} parent=1 // pred_fallthru
      _
    // Predicated region
    $region58: #{tpu_custom_call.1} parent=1 // pred_check
      _
    $region59: #{tpu_custom_call.1} parent=1 // pred_check_branch
      %80 = sbr.rel (0) target = $region61
    $region60: #{tpu_custom_call.1} parent=1 // pred_region
      %81 = dma.done [#allocation5], 2048
    $region61: #{tpu_custom_call.1} parent=1 // pred_fallthru
      _
    // Predicated region
    $region62: #{tpu_custom_call.1} parent=1 // pred_check
      _
    $region63: #{tpu_custom_call.1} parent=1 // pred_check_branch
      %83 = sbr.rel (0) target = $region65
    $region64: #{tpu_custom_call.1} parent=1 // pred_region
      %84 = dma.done [#allocation5], 2048
    $region65: #{tpu_custom_call.1} parent=1 // pred_fallthru
      _
    %v86 = vld [vmem:[%s0] sm:$0x3]
    %v87 = vpack.c.bf16 %v86, %v86
    %v88 = vld [vmem:[%s4] sm:$0xff]
    %v89 = vld [vmem:[%s4 + $0x8] sm:$0xff]
    %v90 = vld [vmem:[%s4 + $0x10] sm:$0xff]
    %v91 = vld [vmem:[%s4 + $0x18] sm:$0xff]
    %v92 = vld [vmem:[%s4 + $0x20] sm:$0xff]
    %v93 = vld [vmem:[%s4 + $0x28] sm:$0xff]
    %v94 = vld [vmem:[%s4 + $0x30] sm:$0xff]
    %v95 = vld [vmem:[%s4 + $0x38] sm:$0xff]
    %v96 = vld [vmem:[%s4 + $0x40] sm:$0xff]
    %v97 = vld [vmem:[%s4 + $0x48] sm:$0xff]
    %v98 = vld [vmem:[%s4 + $0x50] sm:$0xff]
    %v99 = vld [vmem:[%s4 + $0x58] sm:$0xff]
    %v100 = vld [vmem:[%s4 + $0x60] sm:$0xff]
    %v101 = vld [vmem:[%s4 + $0x68] sm:$0xff]
    %v102 = vld [vmem:[%s4 + $0x70] sm:$0xff]
    %v103 = vld [vmem:[%s4 + $0x78] sm:$0xff]
    %v104 = vld [vmem:[%s1] sm:$0x3]
    %v105 = vpack.c.bf16 %v104, %v104
    %v106 = vld [vmem:[#allocation2] sm:$0xff]
    %v107 = vld [vmem:[#allocation2 + $0x8] sm:$0xff]
    %v108 = vld [vmem:[#allocation2 + $0x10] sm:$0xff]
    %v109 = vld [vmem:[#allocation2 + $0x18] sm:$0xff]
    %v110 = vld [vmem:[#allocation2 + $0x20] sm:$0xff]
    %v111 = vld [vmem:[#allocation2 + $0x28] sm:$0xff]
    %v112 = vld [vmem:[#allocation2 + $0x30] sm:$0xff]
    %v113 = vld [vmem:[#allocation2 + $0x38] sm:$0xff]
    %v114 = vld [vmem:[#allocation2 + $0x40] sm:$0xff]
    %v115 = vld [vmem:[#allocation2 + $0x48] sm:$0xff]
    %v116 = vld [vmem:[#allocation2 + $0x50] sm:$0xff]
    %v117 = vld [vmem:[#allocation2 + $0x58] sm:$0xff]
    %v118 = vld [vmem:[#allocation2 + $0x60] sm:$0xff]
    %v119 = vld [vmem:[#allocation2 + $0x68] sm:$0xff]
    %v120 = vld [vmem:[#allocation2 + $0x70] sm:$0xff]
    %v121 = vld [vmem:[#allocation2 + $0x78] sm:$0xff]
    %v138 = vunpack.c.l.b16 %v106
    %v139 = vunpack.c.h.b16 %v106
    %v140 = vunpack.c.l.b16 %v107
    %v141 = vunpack.c.h.b16 %v107
    %v142 = vunpack.c.l.b16 %v108
    %v143 = vunpack.c.h.b16 %v108
    %v144 = vunpack.c.l.b16 %v109
    %v145 = vunpack.c.h.b16 %v109
    %v146 = vunpack.c.l.b16 %v110
    %v147 = vunpack.c.h.b16 %v110
    %v148 = vunpack.c.l.b16 %v111
    %v149 = vunpack.c.h.b16 %v111
    %v150 = vunpack.c.l.b16 %v112
    %v151 = vunpack.c.h.b16 %v112
    %v152 = vunpack.c.l.b16 %v113
    %v153 = vunpack.c.h.b16 %v113
    %v154 = vunpack.c.l.b16 %v114
    %v155 = vunpack.c.h.b16 %v114
    %v156 = vunpack.c.l.b16 %v115
    %v157 = vunpack.c.h.b16 %v115
    %v158 = vunpack.c.l.b16 %v116
    %v159 = vunpack.c.h.b16 %v116
    %v160 = vunpack.c.l.b16 %v117
    %v161 = vunpack.c.h.b16 %v117
    %v162 = vunpack.c.l.b16 %v118
    %v163 = vunpack.c.h.b16 %v118
    %v164 = vunpack.c.l.b16 %v119
    %v165 = vunpack.c.h.b16 %v119
    %v166 = vunpack.c.l.b16 %v120
    %v167 = vunpack.c.h.b16 %v120
    %v168 = vunpack.c.l.b16 %v121
    %v169 = vunpack.c.h.b16 %v121
    %v170 = vpack.c.b16 %v140, %v138
    %v171 = vpack.c.b16 %v141, %v139
    %v172 = vpack.c.b16 %v144, %v142
    %v173 = vpack.c.b16 %v145, %v143
    %v174 = vpack.c.b16 %v148, %v146
    %v175 = vpack.c.b16 %v149, %v147
    %v176 = vpack.c.b16 %v152, %v150
    %v177 = vpack.c.b16 %v153, %v151
    %v178 = vpack.c.b16 %v156, %v154
    %v179 = vpack.c.b16 %v157, %v155
    %v180 = vpack.c.b16 %v160, %v158
    %v181 = vpack.c.b16 %v161, %v159
    %v182 = vpack.c.b16 %v164, %v162
    %v183 = vpack.c.b16 %v165, %v163
    %v184 = vpack.c.b16 %v168, %v166
    %v185 = vpack.c.b16 %v169, %v167
    %202 = vmatprep.subr.bf16.mxu0 %v171
    %203 = vmatpush1.bf16.msra.mxu0 %v170
    %204 = vmatprep.subr.bf16.mxu0 %v173
    %205 = vmatpush1.bf16.msra.mxu0 %v172
    %206 = vmatprep.subr.bf16.mxu0 %v175
    %207 = vmatpush1.bf16.msra.mxu0 %v174
    %208 = vmatprep.subr.bf16.mxu0 %v177
    %209 = vmatpush1.bf16.msra.mxu0 %v176
    %210 = vmatprep.subr.bf16.mxu0 %v179
    %211 = vmatpush1.bf16.msra.mxu0 %v178
    %212 = vmatprep.subr.bf16.mxu0 %v181
    %213 = vmatpush1.bf16.msra.mxu0 %v180
    %214 = vmatprep.subr.bf16.mxu0 %v183
    %215 = vmatpush1.bf16.msra.mxu0 %v182
    %216 = vmatprep.subr.bf16.mxu0 %v185
    %217 = vmatpush1.bf16.msra.mxu0 %v184
    %218 = vmatprep.subr.bf16.mxu0 0
    %219 = vmatpush1.bf16.msra.mxu0 0
    %220 = vmatprep.subr.bf16.mxu0 0
    %221 = vmatpush1.bf16.msra.mxu0 0
    %222 = vmatprep.subr.bf16.mxu0 0
    %223 = vmatpush1.bf16.msra.mxu0 0
    %224 = vmatprep.subr.bf16.mxu0 0
    %225 = vmatpush1.bf16.msra.mxu0 0
    %226 = vmatprep.subr.bf16.mxu0 0
    %227 = vmatpush1.bf16.msra.mxu0 0
    %228 = vmatprep.subr.bf16.mxu0 0
    %229 = vmatpush1.bf16.msra.mxu0 0
    %230 = vmatprep.subr.bf16.mxu0 0
    %231 = vmatpush1.bf16.msra.mxu0 0
    %232 = vmatprep.subr.bf16.mxu0 0
    %233 = vmatpush1.bf16.msra.mxu0 0
    %234 = vmatprep.mubr.bf16.mxu0 0
    %235 = vmatmul.mubr.bf16.gmra.mrb[0].mxu0 %v105
    %v236 = vpop.f32.mrb[0].mxu0
    %v237 = vadd.f32 0.0, %v236
    %v238 = vpop.f32.mrb[0].mxu0
    %v239 = vadd.f32 0.0, %v238
    %v240 = vpop.f32.mrb[0].mxu0
    %v241 = vpop.f32.mrb[0].mxu0
    %242 = vdwg.mxu0
    %v259 = vunpack.c.l.b16 %v88
    %v260 = vunpack.c.h.b16 %v88
    %v261 = vunpack.c.l.b16 %v89
    %v262 = vunpack.c.h.b16 %v89
    %v263 = vunpack.c.l.b16 %v90
    %v264 = vunpack.c.h.b16 %v90
    %v265 = vunpack.c.l.b16 %v91
    %v266 = vunpack.c.h.b16 %v91
    %v267 = vunpack.c.l.b16 %v92
    %v268 = vunpack.c.h.b16 %v92
    %v269 = vunpack.c.l.b16 %v93
    %v270 = vunpack.c.h.b16 %v93
    %v271 = vunpack.c.l.b16 %v94
    %v272 = vunpack.c.h.b16 %v94
    %v273 = vunpack.c.l.b16 %v95
    %v274 = vunpack.c.h.b16 %v95
    %v275 = vunpack.c.l.b16 %v96
    %v276 = vunpack.c.h.b16 %v96
    %v277 = vunpack.c.l.b16 %v97
    %v278 = vunpack.c.h.b16 %v97
    %v279 = vunpack.c.l.b16 %v98
    %v280 = vunpack.c.h.b16 %v98
    %v281 = vunpack.c.l.b16 %v99
    %v282 = vunpack.c.h.b16 %v99
    %v283 = vunpack.c.l.b16 %v100
    %v284 = vunpack.c.h.b16 %v100
    %v285 = vunpack.c.l.b16 %v101
    %v286 = vunpack.c.h.b16 %v101
    %v287 = vunpack.c.l.b16 %v102
    %v288 = vunpack.c.h.b16 %v102
    %v289 = vunpack.c.l.b16 %v103
    %v290 = vunpack.c.h.b16 %v103
    %v291 = vpack.c.b16 %v261, %v259
    %v292 = vpack.c.b16 %v262, %v260
    %v293 = vpack.c.b16 %v265, %v263
    %v294 = vpack.c.b16 %v266, %v264
    %v295 = vpack.c.b16 %v269, %v267
    %v296 = vpack.c.b16 %v270, %v268
    %v297 = vpack.c.b16 %v273, %v271
    %v298 = vpack.c.b16 %v274, %v272
    %v299 = vpack.c.b16 %v277, %v275
    %v300 = vpack.c.b16 %v278, %v276
    %v301 = vpack.c.b16 %v281, %v279
    %v302 = vpack.c.b16 %v282, %v280
    %v303 = vpack.c.b16 %v285, %v283
    %v304 = vpack.c.b16 %v286, %v284
    %v305 = vpack.c.b16 %v289, %v287
    %v306 = vpack.c.b16 %v290, %v288
    %323 = vmatprep.subr.bf16.mxu0 %v292
    %324 = vmatpush1.bf16.msra.mxu0 %v291
    %325 = vmatprep.subr.bf16.mxu0 %v294
    %326 = vmatpush1.bf16.msra.mxu0 %v293
    %327 = vmatprep.subr.bf16.mxu0 %v296
    %328 = vmatpush1.bf16.msra.mxu0 %v295
    %329 = vmatprep.subr.bf16.mxu0 %v298
    %330 = vmatpush1.bf16.msra.mxu0 %v297
    %331 = vmatprep.subr.bf16.mxu0 %v300
    %332 = vmatpush1.bf16.msra.mxu0 %v299
    %333 = vmatprep.subr.bf16.mxu0 %v302
    %334 = vmatpush1.bf16.msra.mxu0 %v301
    %335 = vmatprep.subr.bf16.mxu0 %v304
    %336 = vmatpush1.bf16.msra.mxu0 %v303
    %337 = vmatprep.subr.bf16.mxu0 %v306
    %338 = vmatpush1.bf16.msra.mxu0 %v305
    %339 = vmatprep.subr.bf16.mxu0 0
    %340 = vmatpush1.bf16.msra.mxu0 0
    %341 = vmatprep.subr.bf16.mxu0 0
    %342 = vmatpush1.bf16.msra.mxu0 0
    %343 = vmatprep.subr.bf16.mxu0 0
    %344 = vmatpush1.bf16.msra.mxu0 0
    %345 = vmatprep.subr.bf16.mxu0 0
    %346 = vmatpush1.bf16.msra.mxu0 0
    %347 = vmatprep.subr.bf16.mxu0 0
    %348 = vmatpush1.bf16.msra.mxu0 0
    %349 = vmatprep.subr.bf16.mxu0 0
    %350 = vmatpush1.bf16.msra.mxu0 0
    %351 = vmatprep.subr.bf16.mxu0 0
    %352 = vmatpush1.bf16.msra.mxu0 0
    %353 = vmatprep.subr.bf16.mxu0 0
    %354 = vmatpush1.bf16.msra.mxu0 0
    %355 = vmatprep.mubr.bf16.mxu0 0
    %356 = vmatmul.mubr.bf16.gmra.mrb[0].mxu0 %v87
    %v357 = vpop.f32.mrb[0].mxu0
    %v358 = vadd.f32 %v237, %v357
    %v359 = vpop.f32.mrb[0].mxu0
    %v360 = vadd.f32 %v239, %v359
    %v361 = vpop.f32.mrb[0].mxu0
    %v362 = vpop.f32.mrb[0].mxu0
    %363 = vdwg.mxu0
    %v364 = vld [vmem:[%s2] sm:$0x3]
    %v365 = vpack.c.bf16 %v364, %v364
    %v366 = vld [vmem:[#allocation4] sm:$0xff]
    %v367 = vld [vmem:[#allocation4 + $0x8] sm:$0xff]
    %v368 = vld [vmem:[#allocation4 + $0x10] sm:$0xff]
    %v369 = vld [vmem:[#allocation4 + $0x18] sm:$0xff]
    %v370 = vld [vmem:[#allocation4 + $0x20] sm:$0xff]
    %v371 = vld [vmem:[#allocation4 + $0x28] sm:$0xff]
    %v372 = vld [vmem:[#allocation4 + $0x30] sm:$0xff]
    %v373 = vld [vmem:[#allocation4 + $0x38] sm:$0xff]
    %v374 = vld [vmem:[#allocation4 + $0x40] sm:$0xff]
    %v375 = vld [vmem:[#allocation4 + $0x48] sm:$0xff]
    %v376 = vld [vmem:[#allocation4 + $0x50] sm:$0xff]
    %v377 = vld [vmem:[#allocation4 + $0x58] sm:$0xff]
    %v378 = vld [vmem:[#allocation4 + $0x60] sm:$0xff]
    %v379 = vld [vmem:[#allocation4 + $0x68] sm:$0xff]
    %v380 = vld [vmem:[#allocation4 + $0x70] sm:$0xff]
    %v381 = vld [vmem:[#allocation4 + $0x78] sm:$0xff]
    %v398 = vunpack.c.l.b16 %v366
    %v399 = vunpack.c.h.b16 %v366
    %v400 = vunpack.c.l.b16 %v367
    %v401 = vunpack.c.h.b16 %v367
    %v402 = vunpack.c.l.b16 %v368
    %v403 = vunpack.c.h.b16 %v368
    %v404 = vunpack.c.l.b16 %v369
    %v405 = vunpack.c.h.b16 %v369
    %v406 = vunpack.c.l.b16 %v370
    %v407 = vunpack.c.h.b16 %v370
    %v408 = vunpack.c.l.b16 %v371
    %v409 = vunpack.c.h.b16 %v371
    %v410 = vunpack.c.l.b16 %v372
    %v411 = vunpack.c.h.b16 %v372
    %v412 = vunpack.c.l.b16 %v373
    %v413 = vunpack.c.h.b16 %v373
    %v414 = vunpack.c.l.b16 %v374
    %v415 = vunpack.c.h.b16 %v374
    %v416 = vunpack.c.l.b16 %v375
    %v417 = vunpack.c.h.b16 %v375
    %v418 = vunpack.c.l.b16 %v376
    %v419 = vunpack.c.h.b16 %v376
    %v420 = vunpack.c.l.b16 %v377
    %v421 = vunpack.c.h.b16 %v377
    %v422 = vunpack.c.l.b16 %v378
    %v423 = vunpack.c.h.b16 %v378
    %v424 = vunpack.c.l.b16 %v379
    %v425 = vunpack.c.h.b16 %v379
    %v426 = vunpack.c.l.b16 %v380
    %v427 = vunpack.c.h.b16 %v380
    %v428 = vunpack.c.l.b16 %v381
    %v429 = vunpack.c.h.b16 %v381
    %v430 = vpack.c.b16 %v400, %v398
    %v431 = vpack.c.b16 %v401, %v399
    %v432 = vpack.c.b16 %v404, %v402
    %v433 = vpack.c.b16 %v405, %v403
    %v434 = vpack.c.b16 %v408, %v406
    %v435 = vpack.c.b16 %v409, %v407
    %v436 = vpack.c.b16 %v412, %v410
    %v437 = vpack.c.b16 %v413, %v411
    %v438 = vpack.c.b16 %v416, %v414
    %v439 = vpack.c.b16 %v417, %v415
    %v440 = vpack.c.b16 %v420, %v418
    %v441 = vpack.c.b16 %v421, %v419
    %v442 = vpack.c.b16 %v424, %v422
    %v443 = vpack.c.b16 %v425, %v423
    %v444 = vpack.c.b16 %v428, %v426
    %v445 = vpack.c.b16 %v429, %v427
    %462 = vmatprep.subr.bf16.mxu0 %v431
    %463 = vmatpush1.bf16.msra.mxu0 %v430
    %464 = vmatprep.subr.bf16.mxu0 %v433
    %465 = vmatpush1.bf16.msra.mxu0 %v432
    %466 = vmatprep.subr.bf16.mxu0 %v435
    %467 = vmatpush1.bf16.msra.mxu0 %v434
    %468 = vmatprep.subr.bf16.mxu0 %v437
    %469 = vmatpush1.bf16.msra.mxu0 %v436
    %470 = vmatprep.subr.bf16.mxu0 %v439
    %471 = vmatpush1.bf16.msra.mxu0 %v438
    %472 = vmatprep.subr.bf16.mxu0 %v441
    %473 = vmatpush1.bf16.msra.mxu0 %v440
    %474 = vmatprep.subr.bf16.mxu0 %v443
    %475 = vmatpush1.bf16.msra.mxu0 %v442
    %476 = vmatprep.subr.bf16.mxu0 %v445
    %477 = vmatpush1.bf16.msra.mxu0 %v444
    %478 = vmatprep.subr.bf16.mxu0 0
    %479 = vmatpush1.bf16.msra.mxu0 0
    %480 = vmatprep.subr.bf16.mxu0 0
    %481 = vmatpush1.bf16.msra.mxu0 0
    %482 = vmatprep.subr.bf16.mxu0 0
    %483 = vmatpush1.bf16.msra.mxu0 0
    %484 = vmatprep.subr.bf16.mxu0 0
    %485 = vmatpush1.bf16.msra.mxu0 0
    %486 = vmatprep.subr.bf16.mxu0 0
    %487 = vmatpush1.bf16.msra.mxu0 0
    %488 = vmatprep.subr.bf16.mxu0 0
    %489 = vmatpush1.bf16.msra.mxu0 0
    %490 = vmatprep.subr.bf16.mxu0 0
    %491 = vmatpush1.bf16.msra.mxu0 0
    %492 = vmatprep.subr.bf16.mxu0 0
    %493 = vmatpush1.bf16.msra.mxu0 0
    %494 = vmatprep.mubr.bf16.mxu0 0
    %495 = vmatmul.mubr.bf16.gmra.mrb[0].mxu0 %v365
    %v496 = vpop.f32.mrb[0].mxu0
    %v497 = vadd.f32 0.0, %v496
    %v498 = vpop.f32.mrb[0].mxu0
    %v499 = vadd.f32 0.0, %v498
    %v500 = vpop.f32.mrb[0].mxu0
    %v501 = vpop.f32.mrb[0].mxu0
    %502 = vdwg.mxu0
    %v503 = vadd.f32 %v358, %v497
    %v504 = vadd.f32 %v360, %v499
    %v505 = vld [vmem:[%s7] sm:$0x3]
    %v507 = vlaneseq
    %v508 = vshrl.u32 %v507, 7
    %v509 = vsub.s32 0, %v508
    %v510 = vrot.slane %v505, %v509
    %v511 = vlaneseq
    %v512 = vshrl.u32 %v511, 7
    %v513 = vsub.s32 1, %v512
    %v514 = vrot.slane %v505, %v513
    %v517 = vadd.f32 %v503, %v510
    %v518 = vadd.f32 %v504, %v514
    %v519 = vmax.f32 %v517, 0.0
    %v520 = vmax.f32 %v518, 0.0
    %v521 = vpack.c.bf16 %v519, %v519
    %v522 = vpack.c.bf16 %v520, %v520
    %v523 = vld [vmem:[#allocation6] sm:$0xf]
    %v524 = vld [vmem:[#allocation6 + $0x4] sm:$0xf]
    %v525 = vld [vmem:[#allocation6 + $0x8] sm:$0xf]
    %v526 = vld [vmem:[#allocation6 + $0xc] sm:$0xf]
    %v527 = vld [vmem:[#allocation6 + $0x10] sm:$0xf]
    %v528 = vld [vmem:[#allocation6 + $0x14] sm:$0xf]
    %v529 = vld [vmem:[#allocation6 + $0x18] sm:$0xf]
    %v530 = vld [vmem:[#allocation6 + $0x1c] sm:$0xf]
    %v531 = vld [vmem:[#allocation6 + $0x20] sm:$0xf]
    %v532 = vld [vmem:[#allocation6 + $0x24] sm:$0xf]
    %v533 = vld [vmem:[#allocation6 + $0x28] sm:$0xf]
    %v534 = vld [vmem:[#allocation6 + $0x2c] sm:$0xf]
    %v535 = vld [vmem:[#allocation6 + $0x30] sm:$0xf]
    %v536 = vld [vmem:[#allocation6 + $0x34] sm:$0xf]
    %v537 = vld [vmem:[#allocation6 + $0x38] sm:$0xf]
    %v538 = vld [vmem:[#allocation6 + $0x3c] sm:$0xf]
    %v539 = vld [vmem:[#allocation6 + $0x40] sm:$0xf]
    %v540 = vld [vmem:[#allocation6 + $0x44] sm:$0xf]
    %v541 = vld [vmem:[#allocation6 + $0x48] sm:$0xf]
    %v542 = vld [vmem:[#allocation6 + $0x4c] sm:$0xf]
    %v543 = vld [vmem:[#allocation6 + $0x50] sm:$0xf]
    %v544 = vld [vmem:[#allocation6 + $0x54] sm:$0xf]
    %v545 = vld [vmem:[#allocation6 + $0x58] sm:$0xf]
    %v546 = vld [vmem:[#allocation6 + $0x5c] sm:$0xf]
    %v547 = vld [vmem:[#allocation6 + $0x60] sm:$0xf]
    %v548 = vld [vmem:[#allocation6 + $0x64] sm:$0xf]
    %v549 = vld [vmem:[#allocation6 + $0x68] sm:$0xf]
    %v550 = vld [vmem:[#allocation6 + $0x6c] sm:$0xf]
    %v551 = vld [vmem:[#allocation6 + $0x70] sm:$0xf]
    %v552 = vld [vmem:[#allocation6 + $0x74] sm:$0xf]
    %v553 = vld [vmem:[#allocation6 + $0x78] sm:$0xf]
    %v554 = vld [vmem:[#allocation6 + $0x7c] sm:$0xf]
    %v555 = vld [vmem:[%s9] sm:$0x1]
    %v557 = vlaneseq
    %v558 = vshrl.u32 %v557, 7
    %v559 = vsub.s32 0, %v558
    %v560 = vrot.slane %v555, %v559
    %v594 = vunpack.c.l.b16 %v523
    %v595 = vunpack.c.l.b16 %v524
    %v596 = vunpack.c.l.b16 %v525
    %v597 = vunpack.c.l.b16 %v526
    %v598 = vunpack.c.l.b16 %v527
    %v599 = vunpack.c.l.b16 %v528
    %v600 = vunpack.c.l.b16 %v529
    %v601 = vunpack.c.l.b16 %v530
    %v602 = vunpack.c.l.b16 %v531
    %v603 = vunpack.c.l.b16 %v532
    %v604 = vunpack.c.l.b16 %v533
    %v605 = vunpack.c.l.b16 %v534
    %v606 = vunpack.c.l.b16 %v535
    %v607 = vunpack.c.l.b16 %v536
    %v608 = vunpack.c.l.b16 %v537
    %v609 = vunpack.c.l.b16 %v538
    %v610 = vunpack.c.l.b16 %v539
    %v611 = vunpack.c.l.b16 %v540
    %v612 = vunpack.c.l.b16 %v541
    %v613 = vunpack.c.l.b16 %v542
    %v614 = vunpack.c.l.b16 %v543
    %v615 = vunpack.c.l.b16 %v544
    %v616 = vunpack.c.l.b16 %v545
    %v617 = vunpack.c.l.b16 %v546
    %v618 = vunpack.c.l.b16 %v547
    %v619 = vunpack.c.l.b16 %v548
    %v620 = vunpack.c.l.b16 %v549
    %v621 = vunpack.c.l.b16 %v550
    %v622 = vunpack.c.l.b16 %v551
    %v623 = vunpack.c.l.b16 %v552
    %v624 = vunpack.c.l.b16 %v553
    %v625 = vunpack.c.l.b16 %v554
    %v626 = vpack.c.b16 %v595, %v594
    %v627 = vpack.c.b16 %v597, %v596
    %v628 = vpack.c.b16 %v599, %v598
    %v629 = vpack.c.b16 %v601, %v600
    %v630 = vpack.c.b16 %v603, %v602
    %v631 = vpack.c.b16 %v605, %v604
    %v632 = vpack.c.b16 %v607, %v606
    %v633 = vpack.c.b16 %v609, %v608
    %v634 = vpack.c.b16 %v611, %v610
    %v635 = vpack.c.b16 %v613, %v612
    %v636 = vpack.c.b16 %v615, %v614
    %v637 = vpack.c.b16 %v617, %v616
    %v638 = vpack.c.b16 %v619, %v618
    %v639 = vpack.c.b16 %v621, %v620
    %v640 = vpack.c.b16 %v623, %v622
    %v641 = vpack.c.b16 %v625, %v624
    %658 = vmatprep.subr.bf16.mxu0 0
    %659 = vmatpush1.bf16.msra.mxu0 %v626
    %660 = vmatprep.subr.bf16.mxu0 0
    %661 = vmatpush1.bf16.msra.mxu0 %v627
    %662 = vmatprep.subr.bf16.mxu0 0
    %663 = vmatpush1.bf16.msra.mxu0 %v628
    %664 = vmatprep.subr.bf16.mxu0 0
    %665 = vmatpush1.bf16.msra.mxu0 %v629
    %666 = vmatprep.subr.bf16.mxu0 0
    %667 = vmatpush1.bf16.msra.mxu0 %v630
    %668 = vmatprep.subr.bf16.mxu0 0
    %669 = vmatpush1.bf16.msra.mxu0 %v631
    %670 = vmatprep.subr.bf16.mxu0 0
    %671 = vmatpush1.bf16.msra.mxu0 %v632
    %672 = vmatprep.subr.bf16.mxu0 0
    %673 = vmatpush1.bf16.msra.mxu0 %v633
    %674 = vmatprep.subr.bf16.mxu0 0
    %675 = vmatpush1.bf16.msra.mxu0 %v634
    %676 = vmatprep.subr.bf16.mxu0 0
    %677 = vmatpush1.bf16.msra.mxu0 %v635
    %678 = vmatprep.subr.bf16.mxu0 0
    %679 = vmatpush1.bf16.msra.mxu0 %v636
    %680 = vmatprep.subr.bf16.mxu0 0
    %681 = vmatpush1.bf16.msra.mxu0 %v637
    %682 = vmatprep.subr.bf16.mxu0 0
    %683 = vmatpush1.bf16.msra.mxu0 %v638
    %684 = vmatprep.subr.bf16.mxu0 0
    %685 = vmatpush1.bf16.msra.mxu0 %v639
    %686 = vmatprep.subr.bf16.mxu0 0
    %687 = vmatpush1.bf16.msra.mxu0 %v640
    %688 = vmatprep.subr.bf16.mxu0 0
    %689 = vmatpush1.bf16.msra.mxu0 %v641
    %690 = vmatprep.mubr.bf16.mxu0 %v522
    %691 = vmatmul.mubr.bf16.gmra.mrb[0].mxu0 %v521
    %v692 = vpop.f32.mrb[0].mxu0
    %v693 = vadd.f32 %v560, %v692
    %v694 = vpop.f32.mrb[0].mxu0
    %v695 = vpop.f32.mrb[0].mxu0
    %v696 = vpop.f32.mrb[0].mxu0
    %697 = vdwg.mxu0
    %v698 = vmax.f32 %v693, 0.0
    %v699 = vld [vmem:[%s10] sm:$0xff]
    %v700 = vld [vmem:[%s10 + $0x8] sm:$0xff]
    %v701 = vld [vmem:[%s10 + $0x10] sm:$0xff]
    %v702 = vld [vmem:[%s10 + $0x18] sm:$0xff]
    %v703 = vld [vmem:[%s10 + $0x20] sm:$0xff]
    %v704 = vld [vmem:[%s10 + $0x28] sm:$0xff]
    %v705 = vld [vmem:[%s10 + $0x30] sm:$0xff]
    %v706 = vld [vmem:[%s10 + $0x38] sm:$0xff]
    %v707 = vld [vmem:[%s10 + $0x40] sm:$0xff]
    %v708 = vld [vmem:[%s10 + $0x48] sm:$0xff]
    %v709 = vld [vmem:[%s10 + $0x50] sm:$0xff]
    %v710 = vld [vmem:[%s10 + $0x58] sm:$0xff]
    %v711 = vld [vmem:[%s10 + $0x60] sm:$0xff]
    %v712 = vld [vmem:[%s10 + $0x68] sm:$0xff]
    %v713 = vld [vmem:[%s10 + $0x70] sm:$0xff]
    %v714 = vld [vmem:[%s10 + $0x78] sm:$0xff]
    %v715 = vld [vmem:[%s3] sm:$0x3]
    %v716 = vld [vmem:[%s11] sm:$0xff]
    %v717 = vld [vmem:[%s11 + $0x8] sm:$0xff]
    %vm718 = vcmask 130048
    %v720 = vsel %vm718, %v715, 0
    %722 = vmatprep.subr.mxu0 0.0
    %723 = vmatpush1.msra.mxu0 %v716
    %724 = vmatprep.subr.mxu0 0.0
    %725 = vmatpush1.msra.mxu0 %v717
    %726 = vmatprep.subr.mxu0 0.0
    %727 = vmatpush1.msra.mxu0 0.0
    %728 = vmatprep.subr.mxu0 0.0
    %729 = vmatpush1.msra.mxu0 0.0
    %730 = vmatprep.subr.mxu0 0.0
    %731 = vmatpush1.msra.mxu0 0.0
    %732 = vmatprep.subr.mxu0 0.0
    %733 = vmatpush1.msra.mxu0 0.0
    %734 = vmatprep.subr.mxu0 0.0
    %735 = vmatpush1.msra.mxu0 0.0
    %736 = vmatprep.subr.mxu0 0.0
    %737 = vmatpush1.msra.mxu0 0.0
    %738 = vmatprep.subr.mxu0 0.0
    %739 = vmatpush1.msra.mxu0 0.0
    %740 = vmatprep.subr.mxu0 0.0
    %741 = vmatpush1.msra.mxu0 0.0
    %742 = vmatprep.subr.mxu0 0.0
    %743 = vmatpush1.msra.mxu0 0.0
    %744 = vmatprep.subr.mxu0 0.0
    %745 = vmatpush1.msra.mxu0 0.0
    %746 = vmatprep.subr.mxu0 0.0
    %747 = vmatpush1.msra.mxu0 0.0
    %748 = vmatprep.subr.mxu0 0.0
    %749 = vmatpush1.msra.mxu0 0.0
    %750 = vmatprep.subr.mxu0 0.0
    %751 = vmatpush1.msra.mxu0 0.0
    %752 = vmatprep.subr.mxu0 0.0
    %753 = vmatpush1.msra.mxu0 0.0
    %754 = vmatprep.subr.mxu0 0.0
    %755 = vmatpush1.msra.mxu0 0.0
    %756 = vmatprep.subr.mxu0 0.0
    %757 = vmatpush1.msra.mxu0 0.0
    %758 = vmatprep.subr.mxu0 0.0
    %759 = vmatpush1.msra.mxu0 0.0
    %760 = vmatprep.subr.mxu0 0.0
    %761 = vmatpush1.msra.mxu0 0.0
    %762 = vmatprep.subr.mxu0 0.0
    %763 = vmatpush1.msra.mxu0 0.0
    %764 = vmatprep.subr.mxu0 0.0
    %765 = vmatpush1.msra.mxu0 0.0
    %766 = vmatprep.subr.mxu0 0.0
    %767 = vmatpush1.msra.mxu0 0.0
    %768 = vmatprep.subr.mxu0 0.0
    %769 = vmatpush1.msra.mxu0 0.0
    %770 = vmatprep.subr.mxu0 0.0
    %771 = vmatpush1.msra.mxu0 0.0
    %772 = vmatprep.subr.mxu0 0.0
    %773 = vmatpush1.msra.mxu0 0.0
    %774 = vmatprep.subr.mxu0 0.0
    %775 = vmatpush1.msra.mxu0 0.0
    %776 = vmatprep.subr.mxu0 0.0
    %777 = vmatpush1.msra.mxu0 0.0
    %778 = vmatprep.subr.mxu0 0.0
    %779 = vmatpush1.msra.mxu0 0.0
    %780 = vmatprep.subr.mxu0 0.0
    %781 = vmatpush1.msra.mxu0 0.0
    %782 = vmatprep.subr.mxu0 0.0
    %783 = vmatpush1.msra.mxu0 0.0
    %784 = vmatprep.subr.mxu0 0.0
    %785 = vmatpush1.msra.mxu0 0.0
    %786 = vmatprep.mubr.f32.mxu0 0.0
    %787 = vmatmul.mubr.f32.gmra.mrb[0].mxu0 %v720
    %v788 = vpop.f32.mrb[0].mxu0
    %v789 = vadd.f32 0.0, %v788
    %v790 = vpop.f32.mrb[0].mxu0
    %791 = vdwg.mxu0
    %792 = vmatprep.subr.mxu0 0.0
    %793 = vmatpush1.msra.mxu0 %v699
    %794 = vmatprep.subr.mxu0 0.0
    %795 = vmatpush1.msra.mxu0 %v700
    %796 = vmatprep.subr.mxu0 0.0
    %797 = vmatpush1.msra.mxu0 %v701
    %798 = vmatprep.subr.mxu0 0.0
    %799 = vmatpush1.msra.mxu0 %v702
    %800 = vmatprep.subr.mxu0 0.0
    %801 = vmatpush1.msra.mxu0 %v703
    %802 = vmatprep.subr.mxu0 0.0
    %803 = vmatpush1.msra.mxu0 %v704
    %804 = vmatprep.subr.mxu0 0.0
    %805 = vmatpush1.msra.mxu0 %v705
    %806 = vmatprep.subr.mxu0 0.0
    %807 = vmatpush1.msra.mxu0 %v706
    %808 = vmatprep.subr.mxu0 0.0
    %809 = vmatpush1.msra.mxu0 %v707
    %810 = vmatprep.subr.mxu0 0.0
    %811 = vmatpush1.msra.mxu0 %v708
    %812 = vmatprep.subr.mxu0 0.0
    %813 = vmatpush1.msra.mxu0 %v709
    %814 = vmatprep.subr.mxu0 0.0
    %815 = vmatpush1.msra.mxu0 %v710
    %816 = vmatprep.subr.mxu0 0.0
    %817 = vmatpush1.msra.mxu0 %v711
    %818 = vmatprep.subr.mxu0 0.0
    %819 = vmatpush1.msra.mxu0 %v712
    %820 = vmatprep.subr.mxu0 0.0
    %821 = vmatpush1.msra.mxu0 %v713
    %822 = vmatprep.subr.mxu0 0.0
    %823 = vmatpush1.msra.mxu0 %v714
    %824 = vmatprep.subr.mxu0 0.0
    %825 = vmatpush1.msra.mxu0 0.0
    %826 = vmatprep.subr.mxu0 0.0
    %827 = vmatpush1.msra.mxu0 0.0
    %828 = vmatprep.subr.mxu0 0.0
    %829 = vmatpush1.msra.mxu0 0.0
    %830 = vmatprep.subr.mxu0 0.0
    %831 = vmatpush1.msra.mxu0 0.0
    %832 = vmatprep.subr.mxu0 0.0
    %833 = vmatpush1.msra.mxu0 0.0
    %834 = vmatprep.subr.mxu0 0.0
    %835 = vmatpush1.msra.mxu0 0.0
    %836 = vmatprep.subr.mxu0 0.0
    %837 = vmatpush1.msra.mxu0 0.0
    %838 = vmatprep.subr.mxu0 0.0
    %839 = vmatpush1.msra.mxu0 0.0
    %840 = vmatprep.subr.mxu0 0.0
    %841 = vmatpush1.msra.mxu0 0.0
    %842 = vmatprep.subr.mxu0 0.0
    %843 = vmatpush1.msra.mxu0 0.0
    %844 = vmatprep.subr.mxu0 0.0
    %845 = vmatpush1.msra.mxu0 0.0
    %846 = vmatprep.subr.mxu0 0.0
    %847 = vmatpush1.msra.mxu0 0.0
    %848 = vmatprep.subr.mxu0 0.0
    %849 = vmatpush1.msra.mxu0 0.0
    %850 = vmatprep.subr.mxu0 0.0
    %851 = vmatpush1.msra.mxu0 0.0
    %852 = vmatprep.subr.mxu0 0.0
    %853 = vmatpush1.msra.mxu0 0.0
    %854 = vmatprep.subr.mxu0 0.0
    %855 = vmatpush1.msra.mxu0 0.0
    %856 = vmatprep.mubr.f32.mxu0 0.0
    %857 = vmatmul.mubr.f32.gmra.mrb[0].mxu0 %v698
    %v858 = vpop.f32.mrb[0].mxu0
    %v859 = vadd.f32 %v789, %v858
    %v860 = vpop.f32.mrb[0].mxu0
    %861 = vdwg.mxu0
    %v862 = vld [vmem:[%s12] sm:$0x1]
    %v864 = vlaneseq
    %v865 = vshrl.u32 %v864, 7
    %v866 = vsub.s32 0, %v865
    %v867 = vrot.slane %v862, %v866
    %v869 = vadd.f32 %v859, %v867
    %870 = vxpose.xlu0.b32.start [1/16] %v869, 128
    %871 = vxpose.xlu0.b32.cont [2/16] 0.0, 128
    %872 = vxpose.xlu0.b32.cont [3/16] 0.0, 128
    %873 = vxpose.xlu0.b32.cont [4/16] 0.0, 128
    %874 = vxpose.xlu0.b32.cont [5/16] 0.0, 128
    %875 = vxpose.xlu0.b32.cont [6/16] 0.0, 128
    %876 = vxpose.xlu0.b32.cont [7/16] 0.0, 128
    %877 = vxpose.xlu0.b32.cont [8/16] 0.0, 128
    %878 = vxpose.xlu0.b32.cont [9/16] 0.0, 128
    %879 = vxpose.xlu0.b32.cont [10/16] 0.0, 128
    %880 = vxpose.xlu0.b32.cont [11/16] 0.0, 128
    %881 = vxpose.xlu0.b32.cont [12/16] 0.0, 128
    %882 = vxpose.xlu0.b32.cont [13/16] 0.0, 128
    %883 = vxpose.xlu0.b32.cont [14/16] 0.0, 128
    %884 = vxpose.xlu0.b32.cont [15/16] 0.0, 128
    %885 = vxpose.xlu0.b32.end [16/16] 0.0, 128
    %v886 = vpop.trf.xlu0
    %v887 = vpop.trf.xlu0
    %v888 = vpop.trf.xlu0
    %v889 = vpop.trf.xlu0
    %v890 = vpop.trf.xlu0
    %v891 = vpop.trf.xlu0
    %v892 = vpop.trf.xlu0
    %v893 = vpop.trf.xlu0
    %v894 = vpop.trf.xlu0
    %v895 = vpop.trf.xlu0
    %v896 = vpop.trf.xlu0
    %v897 = vpop.trf.xlu0
    %v898 = vpop.trf.xlu0
    %v899 = vpop.trf.xlu0
    %v900 = vpop.trf.xlu0
    %v901 = vpop.trf.xlu0
    %vm902 = vcmask 10240
    %903 = vst.msk [vmem:[%s13] sm:$0x7] %vm902, %v886
    // Predicated region
    $region66: #{tpu_custom_call.1} parent=1 // pred_check
      _
    $region67: #{tpu_custom_call.1} parent=1 // pred_check_branch
      %905 = sbr.rel (0) target = $region69
    $region68: #{tpu_custom_call.1} parent=1 // pred_region
      _
    $region69: #{tpu_custom_call.1} parent=1 // pred_fallthru
      _
    // Predicated region
    $region70: #{tpu_custom_call.1} parent=1 // pred_check
      _
    $region71: #{tpu_custom_call.1} parent=1 // pred_check_branch
      %907 = sbr.rel (0) target = $region73
    $region72: #{tpu_custom_call.1} parent=1 // pred_region
      _
    $region73: #{tpu_custom_call.1} parent=1 // pred_fallthru
      _
    %908 = vsyncpa [#allocation3], 1
    %909 = vsyncpa [#allocation5], 1

</llo_original>
